<compile_context>
chip_gen: v5e
topology: v5e:2x2
jax: 0.10.0
libtpu: 0.0.40
codegen_flags: <defaults>
</compile_context>

<pallas_src>
import functools

import jax
import jax.numpy as jnp
from jax.experimental import pallas as pl
from jax.experimental.pallas import tpu as pltpu


def _knn_loss_kernel(logits_ref, knn_ref, tgt_ref, ce_out_ref, knn_out_ref,
                     ce_acc, knn_acc, *, n_rows, tile_n, steps):
    p = pl.program_id(0)   # core / partial-sum index ("parallel")
    i = pl.program_id(1)   # batch-block index within this core ("arbitrary")

    @pl.when(i == 0)
    def _():
        ce_acc[...] = jnp.zeros_like(ce_acc)
        knn_acc[...] = jnp.zeros_like(knn_acc)

    # Natural (tile_n, C) HBM blocks -> lane-dense (C, tile_n): classes end up
    # on sublanes (C << 128), batch rows on the 128-lane axis, so all the
    # per-row reductions below touch ~C/128 of the vregs a (tile_n, C)-layout
    # computation would.  One XLU transpose pass per array per step.
    logits = logits_ref[...].astype(jnp.float32).T            # (C, T)
    knn = knn_ref[...].astype(jnp.float32).T                   # (C, T)
    tgt = tgt_ref[...]                                          # (1, T) int32
    c, t = logits.shape

    # Target mask reused for both gathers (no f32 one-hot materialized).
    # NOTE: out-of-range targets silently gather 0 (same as the old version).
    class_ids = jax.lax.broadcasted_iota(jnp.int32, (c, t), 0)
    mask = class_ids == tgt                                     # (C, T) bool

    # Valid-column mask: columns whose global row index is >= N are ragged-edge
    # padding (unspecified data) and must be selected out before accumulation.
    row0 = (p * steps + i) * tile_n
    col = jax.lax.broadcasted_iota(jnp.int32, (1, t), 1) + row0
    valid = col < n_rows                                        # (1, T) bool

    # ---- cross entropy: gather-first, no full log_softmax matrix ----
    m = jnp.max(logits, axis=0, keepdims=True)                  # (1, T)
    lse = jnp.log(jnp.sum(jnp.exp(logits - m), axis=0, keepdims=True))
    tgt_logit = jnp.sum(jnp.where(mask, logits, 0.0), axis=0, keepdims=True)
    ce_rows = (m + lse) - tgt_logit                             # (1, T)

    # ---- knn nll: log(a) - log(b) instead of full (C,T) divide + log ----
    rowsum = jnp.sum(knn, axis=0, keepdims=True)                # (1, T)
    knn_tgt = jnp.sum(jnp.where(mask, knn, 0.0), axis=0, keepdims=True)
    log_p_tgt = jnp.maximum(jnp.log(knn_tgt) - jnp.log(rowsum),
                            jnp.float32(-100.0))
    knn_rows = -log_p_tgt                                       # (1, T)

    # Lane-resident accumulate (plain VPU add per step); padded/garbage columns
    # select to 0 (select does not propagate NaN/inf from the dead branch).
    ce_acc[...] += jnp.where(valid, ce_rows, 0.0)
    knn_acc[...] += jnp.where(valid, knn_rows, 0.0)

    # Single cross-lane reduce to per-core scalars, only on this core's last step.
    @pl.when(i == steps - 1)
    def _():
        ce_out_ref[...] = jnp.sum(ce_acc[...]).reshape(1, 1, 1).astype(jnp.float32)
        knn_out_ref[...] = jnp.sum(knn_acc[...]).reshape(1, 1, 1).astype(jnp.float32)


def knn_loss(pred_logits, knn_logits, targets, coeff):
    """pred_logits, knn_logits: (N, C) float; targets: (N,) int; coeff: scalar."""
    n, c = pred_logits.shape

    # Batch tile (rows per grid step).  8192 rows keeps the total VMEM footprint
    # (~17 MiB with lane padding + double buffering) inside the 32 MiB limit we
    # request below, while making the ~0.35 us per-step overhead negligible.
    tile_cap = 8192
    tile_n = min(tile_cap, ((n + 7) // 8) * 8)       # multiple of 8 (or == N)
    num_blocks = pl.cdiv(n, tile_n)

    # 2-way "parallel" split of the batch blocks: one partial sum per TensorCore
    # on v7x (2 TCs/chip); a harmless sequential split on v5e/v6e.
    n_cores = 2 if num_blocks >= 2 else 1
    steps = pl.cdiv(num_blocks, n_cores)

    # Targets as a lane-dense (1, n_pad) int32 row.  This is the only wrapper-
    # side copy left (4 bytes/row); the big (N, C) arrays are consumed in their
    # natural layout with no pre-pass.
    n_pad = n_cores * steps * tile_n
    tgt_row = jnp.zeros((1, n_pad), jnp.int32).at[0, :n].set(
        targets.astype(jnp.int32))

    def data_map(p, i):
        # Clamp fully-out-of-range block indices (possible when 2*steps >
        # num_blocks); the kernel's `valid` mask zeroes their contribution.
        return (jnp.minimum(p * steps + i, num_blocks - 1), 0)

    def tgt_map(p, i):
        return (0, p * steps + i)

    def out_map(p, i):
        return (p, 0, 0)

    kernel = functools.partial(
        _knn_loss_kernel, n_rows=n, tile_n=tile_n, steps=steps)

    itemsize = jnp.dtype(pred_logits.dtype).itemsize
    cost = pl.CostEstimate(
        flops=int(10 * n * c),
        transcendentals=int(n * c + 2 * n),
        bytes_accessed=int(2 * n * c * itemsize + 4 * n + 8 * n_cores),
    )

    ce_part, knn_part = pl.pallas_call(
        kernel,
        out_shape=(jax.ShapeDtypeStruct((n_cores, 1, 1), jnp.float32),
                   jax.ShapeDtypeStruct((n_cores, 1, 1), jnp.float32)),
        grid_spec=pltpu.PrefetchScalarGridSpec(
            num_scalar_prefetch=0,
            grid=(n_cores, steps),
            in_specs=[
                pl.BlockSpec((tile_n, c), data_map),   # pred_logits, natural (N, C)
                pl.BlockSpec((tile_n, c), data_map),   # knn_logits,  natural (N, C)
                pl.BlockSpec((1, tile_n), tgt_map),    # targets row  (1, n_pad)
            ],
            out_specs=[
                pl.BlockSpec((1, 1, 1), out_map),      # per-core sum of ce rows
                pl.BlockSpec((1, 1, 1), out_map),      # per-core sum of knn rows
            ],
            scratch_shapes=[
                pltpu.VMEM((1, tile_n), jnp.float32),  # lane-resident ce accumulator
                pltpu.VMEM((1, tile_n), jnp.float32),  # lane-resident knn accumulator
            ],
        ),
        compiler_params=pltpu.CompilerParams(
            dimension_semantics=("parallel", "arbitrary"),
            vmem_limit_bytes=32 * 1024 * 1024),
        cost_estimate=cost,
    )(pred_logits, knn_logits, tgt_row)

    # Combine the per-core partials and apply the coeff / N finalization here
    # (a handful of scalar ops; keeps the kernel output path trivial).
    inv_n = jnp.float32(1.0 / n)
    ce_mean = jnp.sum(ce_part) * inv_n
    knn_mean = jnp.sum(knn_part) * inv_n
    coeff_f = jnp.asarray(coeff, dtype=jnp.float32)
    loss = ce_mean + ce_mean * (knn_mean * coeff_f)
    return loss * inv_n


def _knn_loss_ref(pred_logits, knn_logits, targets, coeff):
    # Pure-JAX reference of the PyTorch forward, for correctness checking.
    n = pred_logits.shape[0]
    logp = jax.nn.log_softmax(pred_logits.astype(jnp.float32), axis=-1)
    ce = -jnp.mean(logp[jnp.arange(n), targets])
    p = knn_logits.astype(jnp.float32) / jnp.sum(
        knn_logits.astype(jnp.float32), axis=-1, keepdims=True)
    lp = jnp.maximum(jnp.log(p), -100.0)
    knn_nll = -jnp.mean(lp[jnp.arange(n), targets])
    loss = ce + ce * (knn_nll * coeff)
    return loss / n


if __name__ == "__main__":
    key = jax.random.PRNGKey(0)
    k1, k2, k3 = jax.random.split(key, 3)

    N, C = 8, 4
    pred_logits = jax.random.normal(k1, (N, C), dtype=jnp.float32)
    # knn logits are non-negative counts/scores in RetroPrompt; keep positive.
    knn_logits = jax.random.uniform(k2, (N, C), dtype=jnp.float32,
                                    minval=0.1, maxval=2.0)
    targets = jax.random.randint(k3, (N,), 0, C, dtype=jnp.int32)
    coeff = 0.3

    out = knn_loss(pred_logits, knn_logits, targets, coeff)
    out = jax.block_until_ready(out)

    ref = _knn_loss_ref(pred_logits, knn_logits, targets, coeff)
    assert jnp.allclose(out, ref, rtol=1e-4, atol=1e-6), (out, ref)

    print("KERNEL_OK")
</pallas_src>

<mosaic_0001>
module attributes {stable_mosaic.version = 11 : i64} {
  func.func @_knn_loss_kernel(%arg0: i32, %arg1: i32, %arg2: memref<8x4xf32, #tpu.memory_space<vmem>>, %arg3: memref<8x4xf32, #tpu.memory_space<vmem>>, %arg4: memref<1x8xi32, #tpu.memory_space<vmem>>, %arg5: memref<1x1x1xf32, #tpu.memory_space<vmem>>, %arg6: memref<1x1x1xf32, #tpu.memory_space<vmem>>, %arg7: memref<1x8xf32, #tpu.memory_space<vmem>>, %arg8: memref<1x8xf32, #tpu.memory_space<vmem>>) attributes {dimension_semantics = [#tpu.dimension_semantics<parallel>, #tpu.dimension_semantics<arbitrary>], iteration_bounds = array<i64: 1, 1>, scalar_prefetch = 0 : i64, scratch_operands = 2 : i64, tpu.core_type = #tpu.core_type<tc>, window_params = [{transform_indices = @transform_0, window_bounds = array<i64: 8, 4>}, {transform_indices = @transform_1, window_bounds = array<i64: 8, 4>}, {transform_indices = @transform_2, window_bounds = array<i64: 1, 8>}, {transform_indices = @transform_3, window_bounds = array<i64: 1, 1, 1>}, {transform_indices = @transform_4, window_bounds = array<i64: 1, 1, 1>}]} {
    %c0_i32 = arith.constant 0 : i32
    %0 = arith.cmpi eq, %arg1, %c0_i32 : i32
    %1 = arith.extui %0 : i1 to i32
    %c0_i32_0 = arith.constant 0 : i32
    %2 = arith.cmpi ne, %1, %c0_i32_0 : i32
    scf.if %2 {
      %cst_27 = arith.constant 0.000000e+00 : f32
      %59 = vector.broadcast %cst_27 : f32 to vector<1x8xf32>
      %c0_28 = arith.constant 0 : index
      %c0_29 = arith.constant 0 : index
      %60 = vector.load %arg7[%c0_28, %c0_29] : memref<1x8xf32, #tpu.memory_space<vmem>>, vector<1x8xf32>
      tpu.vector_store %arg7[%c0_28, %c0_29], %59 {strides = array<i32>} : memref<1x8xf32, #tpu.memory_space<vmem>>, vector<1x8xf32>,
      %cst_30 = arith.constant 0.000000e+00 : f32
      %61 = vector.broadcast %cst_30 : f32 to vector<1x8xf32>
      %c0_31 = arith.constant 0 : index
      %c0_32 = arith.constant 0 : index
      %62 = vector.load %arg8[%c0_31, %c0_32] : memref<1x8xf32, #tpu.memory_space<vmem>>, vector<1x8xf32>
      tpu.vector_store %arg8[%c0_31, %c0_32], %61 {strides = array<i32>} : memref<1x8xf32, #tpu.memory_space<vmem>>, vector<1x8xf32>,
    } else {
    }
    %c0 = arith.constant 0 : index
    %c0_1 = arith.constant 0 : index
    %3 = vector.load %arg2[%c0, %c0_1] : memref<8x4xf32, #tpu.memory_space<vmem>>, vector<8x4xf32>
    %4 = tpu.transpose %3, [1, 0] : vector<8x4xf32> -> vector<4x8xf32>
    %c0_2 = arith.constant 0 : index
    %c0_3 = arith.constant 0 : index
    %5 = vector.load %arg3[%c0_2, %c0_3] : memref<8x4xf32, #tpu.memory_space<vmem>>, vector<8x4xf32>
    %6 = tpu.transpose %5, [1, 0] : vector<8x4xf32> -> vector<4x8xf32>
    %c0_4 = arith.constant 0 : index
    %c0_5 = arith.constant 0 : index
    %7 = vector.load %arg4[%c0_4, %c0_5] : memref<1x8xi32, #tpu.memory_space<vmem>>, vector<1x8xi32>
    %8 = tpu.iota {dimensions = array<i32: 0>} : vector<4x8xi32>
    %9 = vector.broadcast %7 : vector<1x8xi32> to vector<4x8xi32>
    %10 = arith.cmpi eq, %8, %9 : vector<4x8xi32>
    %c1_i32 = arith.constant 1 : i32
    %11 = arith.muli %arg0, %c1_i32 : i32
    %12 = arith.addi %11, %arg1 : i32
    %c8_i32 = arith.constant 8 : i32
    %13 = arith.muli %12, %c8_i32 : i32
    %14 = tpu.iota {dimensions = array<i32: 1>} : vector<1x8xi32>
    %15 = vector.broadcast %13 : i32 to vector<1x8xi32>
    %16 = arith.addi %14, %15 : vector<1x8xi32>
    %c8_i32_6 = arith.constant 8 : i32
    %17 = vector.broadcast %c8_i32_6 : i32 to vector<1x8xi32>
    %18 = arith.cmpi slt, %16, %17 : vector<1x8xi32>
    %cst = arith.constant dense<0xFF800000> : vector<8xf32>
    %19 = vector.multi_reduction <maximumf>, %4, %cst [0] : vector<4x8xf32> to vector<8xf32>
    %20 = vector.shape_cast %19 : vector<8xf32> to vector<1x8xf32>
    %21 = vector.broadcast %20 : vector<1x8xf32> to vector<4x8xf32>
    %22 = arith.subf %4, %21 : vector<4x8xf32>
    %23 = math.exp %22 : vector<4x8xf32>
    %cst_7 = arith.constant dense<0.000000e+00> : vector<8xf32>
    %24 = vector.multi_reduction <add>, %23, %cst_7 [0] : vector<4x8xf32> to vector<8xf32>
    %25 = vector.shape_cast %24 : vector<8xf32> to vector<1x8xf32>
    %26 = math.log %25 : vector<1x8xf32>
    %cst_8 = arith.constant 0.000000e+00 : f32
    %27 = vector.broadcast %cst_8 : f32 to vector<4x8xf32>
    %28 = arith.select %10, %4, %27 : vector<4x8xi1>, vector<4x8xf32>
    %cst_9 = arith.constant dense<0.000000e+00> : vector<8xf32>
    %29 = vector.multi_reduction <add>, %28, %cst_9 [0] : vector<4x8xf32> to vector<8xf32>
    %30 = vector.shape_cast %29 : vector<8xf32> to vector<1x8xf32>
    %31 = arith.addf %20, %26 : vector<1x8xf32>
    %32 = arith.subf %31, %30 : vector<1x8xf32>
    %cst_10 = arith.constant dense<0.000000e+00> : vector<8xf32>
    %33 = vector.multi_reduction <add>, %6, %cst_10 [0] : vector<4x8xf32> to vector<8xf32>
    %34 = vector.shape_cast %33 : vector<8xf32> to vector<1x8xf32>
    %cst_11 = arith.constant 0.000000e+00 : f32
    %35 = vector.broadcast %cst_11 : f32 to vector<4x8xf32>
    %36 = arith.select %10, %6, %35 : vector<4x8xi1>, vector<4x8xf32>
    %cst_12 = arith.constant dense<0.000000e+00> : vector<8xf32>
    %37 = vector.multi_reduction <add>, %36, %cst_12 [0] : vector<4x8xf32> to vector<8xf32>
    %38 = vector.shape_cast %37 : vector<8xf32> to vector<1x8xf32>
    %39 = math.log %38 : vector<1x8xf32>
    %40 = math.log %34 : vector<1x8xf32>
    %41 = arith.subf %39, %40 : vector<1x8xf32>
    %cst_13 = arith.constant -1.000000e+02 : f32
    %42 = vector.broadcast %cst_13 : f32 to vector<1x8xf32>
    %43 = arith.maximumf %41, %42 : vector<1x8xf32>
    %cst_14 = arith.constant 0.000000e+00 : f32
    %44 = vector.broadcast %cst_14 : f32 to vector<1x8xf32>
    %45 = arith.subf %44, %43 : vector<1x8xf32>
    %c0_15 = arith.constant 0 : index
    %c0_16 = arith.constant 0 : index
    %46 = vector.load %arg7[%c0_15, %c0_16] : memref<1x8xf32, #tpu.memory_space<vmem>>, vector<1x8xf32>
    %cst_17 = arith.constant 0.000000e+00 : f32
    %47 = vector.broadcast %cst_17 : f32 to vector<1x8xf32>
    %48 = arith.select %18, %32, %47 : vector<1x8xi1>, vector<1x8xf32>
    %49 = arith.addf %46, %48 : vector<1x8xf32>
    %c0_18 = arith.constant 0 : index
    %c0_19 = arith.constant 0 : index
    %50 = vector.load %arg7[%c0_18, %c0_19] : memref<1x8xf32, #tpu.memory_space<vmem>>, vector<1x8xf32>
    tpu.vector_store %arg7[%c0_18, %c0_19], %49 {strides = array<i32>} : memref<1x8xf32, #tpu.memory_space<vmem>>, vector<1x8xf32>,
    %c0_20 = arith.constant 0 : index
    %c0_21 = arith.constant 0 : index
    %51 = vector.load %arg8[%c0_20, %c0_21] : memref<1x8xf32, #tpu.memory_space<vmem>>, vector<1x8xf32>
    %cst_22 = arith.constant 0.000000e+00 : f32
    %52 = vector.broadcast %cst_22 : f32 to vector<1x8xf32>
    %53 = arith.select %18, %45, %52 : vector<1x8xi1>, vector<1x8xf32>
    %54 = arith.addf %51, %53 : vector<1x8xf32>
    %c0_23 = arith.constant 0 : index
    %c0_24 = arith.constant 0 : index
    %55 = vector.load %arg8[%c0_23, %c0_24] : memref<1x8xf32, #tpu.memory_space<vmem>>, vector<1x8xf32>
    tpu.vector_store %arg8[%c0_23, %c0_24], %54 {strides = array<i32>} : memref<1x8xf32, #tpu.memory_space<vmem>>, vector<1x8xf32>,
    %c0_i32_25 = arith.constant 0 : i32
    %56 = arith.cmpi eq, %arg1, %c0_i32_25 : i32
    %57 = arith.extui %56 : i1 to i32
    %c0_i32_26 = arith.constant 0 : i32
    %58 = arith.cmpi ne, %57, %c0_i32_26 : i32
    scf.if %58 {
      %c0_27 = arith.constant 0 : index
      %c0_28 = arith.constant 0 : index
      %59 = vector.load %arg7[%c0_27, %c0_28] : memref<1x8xf32, #tpu.memory_space<vmem>>, vector<1x8xf32>
      %60 = vector.shape_cast %59 : vector<1x8xf32> to vector<1x1x8xf32>
      %cst_29 = arith.constant dense<0.000000e+00> : vector<1xf32>
      %61 = vector.multi_reduction <add>, %60, %cst_29 [1, 2] : vector<1x1x8xf32> to vector<1xf32>
      %62 = vector.shape_cast %61 : vector<1xf32> to vector<1x1x1xf32>
      %63 = vector.extract %62[0, 0, 0] : f32 from vector<1x1x1xf32>
      %64 = vector.broadcast %63 : f32 to vector<1x1x1xf32>
      %c0_30 = arith.constant 0 : index
      %c0_31 = arith.constant 0 : index
      %c0_32 = arith.constant 0 : index
      %65 = vector.load %arg5[%c0_30, %c0_31, %c0_32] : memref<1x1x1xf32, #tpu.memory_space<vmem>>, vector<1x1x1xf32>
      tpu.vector_store %arg5[%c0_30, %c0_31, %c0_32], %64 {strides = array<i32>} : memref<1x1x1xf32, #tpu.memory_space<vmem>>, vector<1x1x1xf32>,
      %c0_33 = arith.constant 0 : index
      %c0_34 = arith.constant 0 : index
      %66 = vector.load %arg8[%c0_33, %c0_34] : memref<1x8xf32, #tpu.memory_space<vmem>>, vector<1x8xf32>
      %67 = vector.shape_cast %66 : vector<1x8xf32> to vector<1x1x8xf32>
      %cst_35 = arith.constant dense<0.000000e+00> : vector<1xf32>
      %68 = vector.multi_reduction <add>, %67, %cst_35 [1, 2] : vector<1x1x8xf32> to vector<1xf32>
      %69 = vector.shape_cast %68 : vector<1xf32> to vector<1x1x1xf32>
      %70 = vector.extract %69[0, 0, 0] : f32 from vector<1x1x1xf32>
      %71 = vector.broadcast %70 : f32 to vector<1x1x1xf32>
      %c0_36 = arith.constant 0 : index
      %c0_37 = arith.constant 0 : index
      %c0_38 = arith.constant 0 : index
      %72 = vector.load %arg6[%c0_36, %c0_37, %c0_38] : memref<1x1x1xf32, #tpu.memory_space<vmem>>, vector<1x1x1xf32>
      tpu.vector_store %arg6[%c0_36, %c0_37, %c0_38], %71 {strides = array<i32>} : memref<1x1x1xf32, #tpu.memory_space<vmem>>, vector<1x1x1xf32>,
    } else {
    }
    return
  }
  func.func @transform_0(%arg0: i32, %arg1: i32) -> (i32, i32) {
    %c1_i32 = arith.constant 1 : i32
    %0 = arith.muli %arg0, %c1_i32 : i32
    %1 = arith.addi %0, %arg1 : i32
    %c0_i32 = arith.constant 0 : i32
    %2 = arith.minsi %1, %c0_i32 : i32
    %c0_i32_0 = arith.constant 0 : i32
    %c0_i32_1 = arith.constant 0 : i32
    return %2, %c0_i32_0 : i32, i32
  }
  func.func @transform_1(%arg0: i32, %arg1: i32) -> (i32, i32) {
    %c1_i32 = arith.constant 1 : i32
    %0 = arith.muli %arg0, %c1_i32 : i32
    %1 = arith.addi %0, %arg1 : i32
    %c0_i32 = arith.constant 0 : i32
    %2 = arith.minsi %1, %c0_i32 : i32
    %c0_i32_0 = arith.constant 0 : i32
    %c0_i32_1 = arith.constant 0 : i32
    return %2, %c0_i32_0 : i32, i32
  }
  func.func @transform_2(%arg0: i32, %arg1: i32) -> (i32, i32) {
    %c1_i32 = arith.constant 1 : i32
    %0 = arith.muli %arg0, %c1_i32 : i32
    %1 = arith.addi %0, %arg1 : i32
    %c0_i32 = arith.constant 0 : i32
    %c0_i32_0 = arith.constant 0 : i32
    return %c0_i32, %1 : i32, i32
  }
  func.func @transform_3(%arg0: i32, %arg1: i32) -> (i32, i32, i32) {
    %c0_i32 = arith.constant 0 : i32
    %c0_i32_0 = arith.constant 0 : i32
    %c0_i32_1 = arith.constant 0 : i32
    return %arg0, %c0_i32, %c0_i32_0 : i32, i32, i32
  }
  func.func @transform_4(%arg0: i32, %arg1: i32) -> (i32, i32, i32) {
    %c0_i32 = arith.constant 0 : i32
    %c0_i32_0 = arith.constant 0 : i32
    %c0_i32_1 = arith.constant 0 : i32
    return %arg0, %c0_i32, %c0_i32_0 : i32, i32, i32
  }
}

</mosaic_0001>

<llo_original>
// kernel: tpu_custom_call.1
$region0: #{tpu_custom_call.1}
  #allocation0 [shape = 'u32[]', space=smem, size = 0x4, offset = 0x4, fixed_abs, tag = 'smem constant byte address 0x4 - core index']
  #allocation1 [shape = 'u32[72,128]{1,0:T(1,128)}', space=vmem, size = 0x9000, scoped, tag = 'internal scratch']
  #allocation2 [shape = 'f32[1,8]{1,0:T(1,128)}', space=vmem, size = 0x200, scoped, tag = 'scratch operand']
  #allocation3 [shape = 'f32[1,8]{1,0:T(1,128)}', space=vmem, size = 0x200, scoped, tag = 'scratch operand']
  %s0 = inlined_call_operand.vmem [shape: f32[8,4], index: 0, kind: input, shape index: {}]
  %s1 = inlined_call_operand.vmem [shape: f32[8,4], index: 1, kind: input, shape index: {}]
  %s2 = inlined_call_operand.vmem [shape: s32[1,8], index: 2, kind: input, shape index: {}]
  %s3 = inlined_call_operand.hbm [shape: f32[1,1,1], index: 3, kind: output, shape index: {0}]
  %s4 = inlined_call_operand.hbm [shape: f32[1,1,1], index: 4, kind: output, shape index: {1}]
  %5 = xla_tuple %s3, %s4
  %s6 = sld [smem:[#allocation0]]
  $region38: #{tpu_custom_call.1} parent=0
    _
  %s8 = ssub.s32 1, %s6
  %s9 = scalar_select 0, %s8, %s6
  $region1: #{tpu_custom_call.1} parent=0
    #allocation4 [shape = 'u8[512]{0}', space=vmem, size = 0x400, scoped, tag = 'output window, operand 0, single buffered']
    #allocation5 [shape = 's32[1]{0}', space=sflag, size = 0x4, scoped, tag = 'scoped memory for tpu_custom_call.1']
    #allocation6 [shape = 'u8[512]{0}', space=vmem, size = 0x400, scoped, tag = 'output window, operand 1, single buffered']
    #allocation7 [shape = 's32[1]{0}', space=sflag, size = 0x4, scoped, tag = 'scoped memory for tpu_custom_call.1']
    %10 = vsyncpa [#allocation5], 0
    %11 = vsyncpa [#allocation7], 0
    // Predicated region
    $region2: #{tpu_custom_call.1} parent=1 // pred_check
      _
    $region3: #{tpu_custom_call.1} parent=1 // pred_check_branch
      %13 = sbr.rel (0) target = $region5
    $region4: #{tpu_custom_call.1} parent=1 // pred_region
      %s14 = sadd.s32 0, 0
      %p15 = scmp.lt.s32.totalorder %s14, 0
      %s16 = scalar_select %p15, %s14, 0
      %p17 = scmp.lt.s32.totalorder %s16, 0
      %s18 = scalar_select %p17, %s16, 0
      %s19 = smul.addr %s18, 8
      %s20 = scalar_lea.vmem %s0, %s19
      %s21 = sadd.s32 0, 0
      %p22 = scmp.lt.s32.totalorder %s21, 0
      %s23 = scalar_select %p22, %s21, 0
    $region5: #{tpu_custom_call.1} parent=1 // pred_fallthru
      _
    // Predicated region
    $region6: #{tpu_custom_call.1} parent=1 // pred_check
      _
    $region7: #{tpu_custom_call.1} parent=1 // pred_check_branch
      %25 = sbr.rel (0) target = $region9
    $region8: #{tpu_custom_call.1} parent=1 // pred_region
      %s26 = sadd.s32 0, 0
      %p27 = scmp.lt.s32.totalorder %s26, 0
      %s28 = scalar_select %p27, %s26, 0
      %p29 = scmp.lt.s32.totalorder %s28, 0
      %s30 = scalar_select %p29, %s28, 0
      %s31 = smul.addr %s30, 8
      %s32 = scalar_lea.vmem %s1, %s31
      %s33 = sadd.s32 0, 0
      %p34 = scmp.lt.s32.totalorder %s33, 0
      %s35 = scalar_select %p34, %s33, 0
    $region9: #{tpu_custom_call.1} parent=1 // pred_fallthru
      _
    // Predicated region
    $region10: #{tpu_custom_call.1} parent=1 // pred_check
      _
    $region11: #{tpu_custom_call.1} parent=1 // pred_check_branch
      %37 = sbr.rel (0) target = $region13
    $region12: #{tpu_custom_call.1} parent=1 // pred_region
      %s38 = sadd.s32 0, 0
      %p39 = scmp.lt.s32.totalorder %s38, 0
      %s40 = scalar_select %p39, %s38, 0
      %s41 = scalar_lea.vmem %s2, %s40
      %s42 = sadd.s32 0, 0
    $region13: #{tpu_custom_call.1} parent=1 // pred_fallthru
      _
    %s43 = sadd.s32 0, 0
    %p44 = scmp.lt.s32.totalorder %s43, 0
    %s45 = scalar_select %p44, %s43, 0
    %p46 = scmp.lt.s32.totalorder %s45, 0
    %s47 = scalar_select %p46, %s45, 0
    %s48 = smul.addr %s47, 8
    %s49 = scalar_lea.vmem %s0, %s48
    %s50 = sadd.s32 0, 0
    %p51 = scmp.lt.s32.totalorder %s50, 0
    %s52 = scalar_select %p51, %s50, 0
    %p53 = scmp.lt.s32.totalorder %s52, 0
    %s54 = scalar_select %p53, %s52, 0
    %s55 = smul.addr %s54, 8
    %s56 = scalar_lea.vmem %s1, %s55
    %s57 = sadd.s32 0, 0
    %p58 = scmp.lt.s32.totalorder %s57, 0
    %s59 = scalar_select %p58, %s57, 0
    %s60 = scalar_lea.vmem %s2, %s59
    %s61 = sadd.s32 0, 0
    %p62 = scmp.lt.s32.totalorder %s61, 0
    %s63 = scalar_select %p62, %s61, 0
    %p64 = scmp.lt.s32.totalorder %s63, 0
    %s65 = scalar_select %p64, %s63, 0
    %s66 = smul.addr %s65, 8
    %s67 = scalar_lea.vmem %s0, %s66
    %s68 = sadd.s32 0, 0
    %p69 = scmp.lt.s32.totalorder %s68, 0
    %s70 = scalar_select %p69, %s68, 0
    %s71 = sadd.s32 0, 0
    %p72 = scmp.lt.s32.totalorder %s71, 0
    %s73 = scalar_select %p72, %s71, 0
    %p74 = scmp.lt.s32.totalorder %s73, 0
    %s75 = scalar_select %p74, %s73, 0
    %s76 = smul.addr %s75, 8
    %s77 = scalar_lea.vmem %s1, %s76
    %s78 = sadd.s32 0, 0
    %p79 = scmp.lt.s32.totalorder %s78, 0
    %s80 = scalar_select %p79, %s78, 0
    %s81 = sadd.s32 0, 0
    %p82 = scmp.lt.s32.totalorder %s81, 0
    %s83 = scalar_select %p82, %s81, 0
    %s84 = scalar_lea.vmem %s2, %s83
    %s85 = sadd.s32 0, 0
    %p86 = scmp.eq.s32.totalorder 0, 0
    // Predicated region
    $region14: #{tpu_custom_call.1} parent=1 // pred_check
      %p87 = pneg %p86
    $region15: #{tpu_custom_call.1} parent=1 // pred_check_branch
      %89 = sbr.rel (%p87) target = $region17
    $region16: #{tpu_custom_call.1} parent=1 // pred_region
      %vm90 = vcmask 57344
      %91 = vst.msk [vmem:[#allocation2] sm:$0x1] %vm90, 0.0
      %92 = vst.msk [vmem:[#allocation3] sm:$0x1] %vm90, 0.0
    $region17: #{tpu_custom_call.1} parent=1 // pred_fallthru
      _
    %v93 = vld [vmem:[%s67] sm:$0xff]
    %94 = vxpose.xlu0.b32.start [1/16] %v93, 128
    %95 = vxpose.xlu0.b32.cont [2/16] 0.0, 128
    %96 = vxpose.xlu0.b32.cont [3/16] 0.0, 128
    %97 = vxpose.xlu0.b32.cont [4/16] 0.0, 128
    %98 = vxpose.xlu0.b32.cont [5/16] 0.0, 128
    %99 = vxpose.xlu0.b32.cont [6/16] 0.0, 128
    %100 = vxpose.xlu0.b32.cont [7/16] 0.0, 128
    %101 = vxpose.xlu0.b32.cont [8/16] 0.0, 128
    %102 = vxpose.xlu0.b32.cont [9/16] 0.0, 128
    %103 = vxpose.xlu0.b32.cont [10/16] 0.0, 128
    %104 = vxpose.xlu0.b32.cont [11/16] 0.0, 128
    %105 = vxpose.xlu0.b32.cont [12/16] 0.0, 128
    %106 = vxpose.xlu0.b32.cont [13/16] 0.0, 128
    %107 = vxpose.xlu0.b32.cont [14/16] 0.0, 128
    %108 = vxpose.xlu0.b32.cont [15/16] 0.0, 128
    %109 = vxpose.xlu0.b32.end [16/16] 0.0, 128
    %v110 = vpop.trf.xlu0
    %v111 = vpop.trf.xlu0
    %v112 = vpop.trf.xlu0
    %v113 = vpop.trf.xlu0
    %v114 = vpop.trf.xlu0
    %v115 = vpop.trf.xlu0
    %v116 = vpop.trf.xlu0
    %v117 = vpop.trf.xlu0
    %v118 = vpop.trf.xlu0
    %v119 = vpop.trf.xlu0
    %v120 = vpop.trf.xlu0
    %v121 = vpop.trf.xlu0
    %v122 = vpop.trf.xlu0
    %v123 = vpop.trf.xlu0
    %v124 = vpop.trf.xlu0
    %v125 = vpop.trf.xlu0
    %v126 = vld [vmem:[%s77] sm:$0xff]
    %127 = vxpose.xlu0.b32.start [1/16] %v126, 128
    %128 = vxpose.xlu0.b32.cont [2/16] 0.0, 128
    %129 = vxpose.xlu0.b32.cont [3/16] 0.0, 128
    %130 = vxpose.xlu0.b32.cont [4/16] 0.0, 128
    %131 = vxpose.xlu0.b32.cont [5/16] 0.0, 128
    %132 = vxpose.xlu0.b32.cont [6/16] 0.0, 128
    %133 = vxpose.xlu0.b32.cont [7/16] 0.0, 128
    %134 = vxpose.xlu0.b32.cont [8/16] 0.0, 128
    %135 = vxpose.xlu0.b32.cont [9/16] 0.0, 128
    %136 = vxpose.xlu0.b32.cont [10/16] 0.0, 128
    %137 = vxpose.xlu0.b32.cont [11/16] 0.0, 128
    %138 = vxpose.xlu0.b32.cont [12/16] 0.0, 128
    %139 = vxpose.xlu0.b32.cont [13/16] 0.0, 128
    %140 = vxpose.xlu0.b32.cont [14/16] 0.0, 128
    %141 = vxpose.xlu0.b32.cont [15/16] 0.0, 128
    %142 = vxpose.xlu0.b32.end [16/16] 0.0, 128
    %v143 = vpop.trf.xlu0
    %v144 = vpop.trf.xlu0
    %v145 = vpop.trf.xlu0
    %v146 = vpop.trf.xlu0
    %v147 = vpop.trf.xlu0
    %v148 = vpop.trf.xlu0
    %v149 = vpop.trf.xlu0
    %v150 = vpop.trf.xlu0
    %v151 = vpop.trf.xlu0
    %v152 = vpop.trf.xlu0
    %v153 = vpop.trf.xlu0
    %v154 = vpop.trf.xlu0
    %v155 = vpop.trf.xlu0
    %v156 = vpop.trf.xlu0
    %v157 = vpop.trf.xlu0
    %v158 = vpop.trf.xlu0
    %v159 = vld [vmem:[%s84] sm:$0x1]
    %v160 = vlaneseq
    %v161 = vshrl.u32 %v160, 7
    %v162 = vperm.slane %v159, 0
    %vm163 = vcmp.eq.s32.totalorder %v161, %v162
    %s164 = sadd.s32 0, 0
    %s165 = smul.u32 %s164, 8
    %v166 = vlaneseq
    %v167 = vand.u32 %v166, 127
    %v168 = vstv %s165
    %v169 = vadd.s32 %v167, %v168
    %vm170 = vcmp.lt.s32.totalorder %v169, 8
    %vm171 = vcmask 60416
    %v172 = vsel %vm171, %v110, -inf
    %v173 = vrot.slane %v172, 4
    %v174 = vmax.f32 %v172, %v173
    %v175 = vrot.slane %v174, 2
    %v176 = vmax.f32 %v174, %v175
    %v177 = vrot.slane %v176, 1
    %v178 = vmax.f32 %v176, %v177
    %v179 = vsub.f32 %v110, %v178
    %v180 = vmul.f32 %v179, 1.442695
    %v181 = vpow.pop %v180
    %v182 = vsel %vm171, %v181, 0.0
    %v183 = vrot.slane %v182, 4
    %v184 = vadd.f32 %v182, %v183
    %v185 = vrot.slane %v184, 2
    %v186 = vadd.f32 %v184, %v185
    %v187 = vrot.slane %v186, 1
    %v188 = vadd.f32 %v186, %v187
    %v189 = vlog2.pop %v188
    %v190 = vmul.f32 %v189, 0.6931472
    %v191 = vsel %vm163, %v110, 0.0
    %v192 = vsel %vm171, %v191, 0.0
    %v193 = vrot.slane %v192, 4
    %v194 = vadd.f32 %v192, %v193
    %v195 = vrot.slane %v194, 2
    %v196 = vadd.f32 %v194, %v195
    %v197 = vrot.slane %v196, 1
    %v198 = vadd.f32 %v196, %v197
    %v199 = vadd.f32 %v178, %v190
    %v200 = vsub.f32 %v199, %v198
    %v201 = vsel %vm171, %v143, 0.0
    %v202 = vrot.slane %v201, 4
    %v203 = vadd.f32 %v201, %v202
    %v204 = vrot.slane %v203, 2
    %v205 = vadd.f32 %v203, %v204
    %v206 = vrot.slane %v205, 1
    %v207 = vadd.f32 %v205, %v206
    %v208 = vsel %vm163, %v143, 0.0
    %v209 = vsel %vm171, %v208, 0.0
    %v210 = vrot.slane %v209, 4
    %v211 = vadd.f32 %v209, %v210
    %v212 = vrot.slane %v211, 2
    %v213 = vadd.f32 %v211, %v212
    %v214 = vrot.slane %v213, 1
    %v215 = vadd.f32 %v213, %v214
    %v216 = vlog2.pop %v215
    %v217 = vmul.f32 %v216, 0.6931472
    %v218 = vlog2.pop %v207
    %v219 = vmul.f32 %v218, 0.6931472
    %v220 = vsub.f32 %v217, %v219
    %v221 = vmax.f32 %v220, -100.0
    %v222 = vsub.f32 0.0, %v221
    %v223 = vld [vmem:[#allocation2] sm:$0x1]
    %v224 = vsel %vm170, %v200, 0.0
    %v225 = vadd.f32 %v223, %v224
    %vm226 = vcmask 57344
    %227 = vst.msk [vmem:[#allocation2] sm:$0x1] %vm226, %v225
    %v228 = vld [vmem:[#allocation3] sm:$0x1]
    %v229 = vsel %vm170, %v222, 0.0
    %v230 = vadd.f32 %v228, %v229
    %231 = vst.msk [vmem:[#allocation3] sm:$0x1] %vm226, %v230
    // Predicated region
    $region18: #{tpu_custom_call.1} parent=1 // pred_check
      %p232 = pneg %p86
    $region19: #{tpu_custom_call.1} parent=1 // pred_check_branch
      %234 = sbr.rel (%p232) target = $region21
    $region20: #{tpu_custom_call.1} parent=1 // pred_region
      %v235 = vld [vmem:[#allocation2] sm:$0x1]
      %v236 = vsel %vm226, %v235, 0.0
      %237 = vadd.xlane.f32.xlu0 %v236
      %v238 = vpop.xlane.xlu0 %237
      %v239 = vrot.slane %v238, 4
      %v240 = vadd.f32 %v238, %v239
      %v241 = vrot.slane %v240, 2
      %v242 = vadd.f32 %v240, %v241
      %v243 = vrot.slane %v242, 1
      %v244 = vadd.f32 %v242, %v243
      %s245 = vtos %v244
      %v246 = vstv %s245
      %vm247 = vcmask 0
      %248 = vst.msk [vmem:[#allocation4] sm:$0x1] %vm247, %v246
      %v249 = vld [vmem:[#allocation3] sm:$0x1]
      %v250 = vsel %vm226, %v249, 0.0
      %251 = vadd.xlane.f32.xlu0 %v250
      %v252 = vpop.xlane.xlu0 %251
      %v253 = vrot.slane %v252, 4
      %v254 = vadd.f32 %v252, %v253
      %v255 = vrot.slane %v254, 2
      %v256 = vadd.f32 %v254, %v255
      %v257 = vrot.slane %v256, 1
      %v258 = vadd.f32 %v256, %v257
      %s259 = vtos %v258
      %v260 = vstv %s259
      %261 = vst.msk [vmem:[#allocation6] sm:$0x1] %vm247, %v260
    $region21: #{tpu_custom_call.1} parent=1 // pred_fallthru
      _
    // Predicated region
    $region22: #{tpu_custom_call.1} parent=1 // pred_check
      _
    $region23: #{tpu_custom_call.1} parent=1 // pred_check_branch
      %263 = sbr.rel (0) target = $region25
    $region24: #{tpu_custom_call.1} parent=1 // pred_region
      %265 = vsyncadd [#allocation5], 0
      %s267 = sshll.u32 [#allocation4], 4
      %s268 = int_to_ptr.vmem [resolvable:$true] %s267
      %s269 = sshll.u32 %s3, 4
      %s270 = int_to_ptr.hbm [resolvable:$true] %s269
      %272 = dma.vmem_to_hbm [thread:$0]  %s268, 16, %s270, [#allocation5]
    $region25: #{tpu_custom_call.1} parent=1 // pred_fallthru
      _
    // Predicated region
    $region26: #{tpu_custom_call.1} parent=1 // pred_check
      _
    $region27: #{tpu_custom_call.1} parent=1 // pred_check_branch
      %274 = sbr.rel (0) target = $region29
    $region28: #{tpu_custom_call.1} parent=1 // pred_region
      %276 = vsyncadd [#allocation7], 0
      %s278 = sshll.u32 [#allocation6], 4
      %s279 = int_to_ptr.vmem [resolvable:$true] %s278
      %s280 = sshll.u32 %s4, 4
      %s281 = int_to_ptr.hbm [resolvable:$true] %s280
      %283 = dma.vmem_to_hbm [thread:$0]  %s279, 16, %s281, [#allocation7]
    $region29: #{tpu_custom_call.1} parent=1 // pred_fallthru
      _
    // Predicated region
    $region30: #{tpu_custom_call.1} parent=1 // pred_check
      _
    $region31: #{tpu_custom_call.1} parent=1 // pred_check_branch
      %285 = sbr.rel (0) target = $region33
    $region32: #{tpu_custom_call.1} parent=1 // pred_region
      %287 = dma.done [#allocation5], 16
    $region33: #{tpu_custom_call.1} parent=1 // pred_fallthru
      _
    // Predicated region
    $region34: #{tpu_custom_call.1} parent=1 // pred_check
      _
    $region35: #{tpu_custom_call.1} parent=1 // pred_check_branch
      %289 = sbr.rel (0) target = $region37
    $region36: #{tpu_custom_call.1} parent=1 // pred_region
      %291 = dma.done [#allocation7], 16
    $region37: #{tpu_custom_call.1} parent=1 // pred_fallthru
      _
    %292 = vsyncpa [#allocation5], 1
    %293 = vsyncpa [#allocation7], 1

</llo_original>
